<compile_context>
chip_gen: v5e
topology: v5e:2x2
jax: 0.10.0
libtpu: 0.0.40
codegen_flags: <defaults>
</compile_context>

<pallas_src>
import jax
import jax.numpy as jnp
from jax.experimental import pallas as pl
from jax.experimental.pallas import tpu as pltpu


# ---------------------------------------------------------------------------
# Kernel
# ---------------------------------------------------------------------------
def _fused_linear_kernel(x_ref, w_ref, b_ref, o_ref):
    # x_ref: (TB, TD)  batch x feature tile of the input (double-buffered by Pallas)
    # w_ref: (TD, 1)   fused weight column chunk (resident / revisited per k)
    # b_ref: (1, 1)    fused bias, in SMEM (scalar read)
    # o_ref: (TB, 1)   f32 output block; resident across the reduction axis k,
    #                  so it doubles as the accumulator (standard P3 pattern).
    k = pl.program_id(1)

    @pl.when(k == 0)
    def _init():
        o_ref[...] = jnp.zeros_like(o_ref)

    # Upcast the tile in-kernel (VPU-cheap) so the multiply/accumulate is f32 even
    # when x streams from HBM as bf16; the MXU matvec avoids any (TB, TD) temporary.
    x_tile = x_ref[...].astype(jnp.float32)
    o_ref[...] += jnp.dot(x_tile, w_ref[...], preferred_element_type=jnp.float32)

    @pl.when(k == pl.num_programs(1) - 1)
    def _finalize():
        o_ref[...] = o_ref[...] + b_ref[0, 0]


# ---------------------------------------------------------------------------
# Parameter fusion (hoisted: call once per parameter set)
# ---------------------------------------------------------------------------
def fuse_params(w1, b1, w2, b2):
    """Fold Linear(D, k) -> Linear(k, 1) (no nonlinearity) into one Linear(D, 1).

    Returns (w_eff, b_eff) with w_eff: (D, 1) column (MXU matvec layout), b_eff: (1, 1).
    """
    w1 = jnp.asarray(w1, jnp.float32)          # (k, D)
    b1 = jnp.asarray(b1, jnp.float32)          # (k,)
    w2 = jnp.asarray(w2, jnp.float32)          # (1, k)
    b2 = jnp.asarray(b2, jnp.float32)          # (1,)
    w_eff = (w2 @ w1).reshape(-1, 1)                                        # (D, 1)
    b_eff = (w2 @ b1.reshape(-1, 1) + b2.reshape(-1, 1)).reshape(1, 1)      # (1, 1)
    return w_eff, b_eff


# ---------------------------------------------------------------------------
# Generation-aware tiling
# ---------------------------------------------------------------------------
def _budgets():
    """(per-x-tile byte target, vmem_limit_bytes), gated on the TPU generation."""
    cap = None
    try:
        cap = int(pltpu.get_tpu_info().vmem_capacity_bytes)
    except Exception:
        cap = None
    if cap is not None and cap >= 100 * 1024 * 1024:
        # v5e / v6e: 128 MiB physical VMEM -> large tiles, generous scoped limit.
        return 28 * 1024 * 1024, 96 * 1024 * 1024
    # v7x (64 MiB per TensorCore) or unknown: stay conservative so it fits everywhere.
    return 14 * 1024 * 1024, 48 * 1024 * 1024


def _pick_tiles(batch, feat, x_itemsize, tile_budget_bytes, feature_tile=None):
    """Choose (batch_tile, feature_tile) = (tb, td)."""
    # --- feature (reduction) tile -------------------------------------------------
    td = feat
    if (feature_tile is not None and feature_tile % 128 == 0
            and feat % feature_tile == 0):
        td = feature_tile                       # explicit override (testing / tuning)
    elif feat % 128 == 0 and 64 * feat * x_itemsize > tile_budget_bytes:
        # Full-D rows would force fewer than ~64 rows per tile; tile the feature axis
        # with the largest 128-multiple divisor of D that keeps the byte target.
        max_td = max(128, (tile_budget_bytes // (64 * x_itemsize)) // 128 * 128)
        td = 128
        for cand in range(min(max_td, feat), 127, -128):
            if feat % cand == 0:
                td = cand
                break
    # TODO(synk): masked tail chunks would allow feature tiling when D % 128 != 0.

    # --- batch tile: sized by bytes so each grid step amortizes the ~0.35us overhead
    tb = max(8, (tile_budget_bytes // (td * x_itemsize)) // 8 * 8)
    if tb >= batch:
        if batch >= 64:
            # Keep >= 2 grid steps so v7x's second TensorCore gets a shard
            # (near-free extra step on single-TC v5e/v6e).
            half = (batch + 1) // 2
            tb = max(8, -(-half // 8) * 8)      # ceil to a multiple of 8
        else:
            tb = batch                          # single full-extent block (always legal)
    return tb, td


# ---------------------------------------------------------------------------
# Forward wrappers
# ---------------------------------------------------------------------------
def weak_classifier_fused_forward(x, w_eff, b_eff, *, feature_tile=None):
    """Forward pass given pre-fused parameters (preferred: hoists param prep).

    x is streamed in its native dtype (e.g. bf16) -- no f32 pre-cast pass over HBM.
    """
    x = jnp.asarray(x)
    B, D = x.shape
    w_eff = jnp.asarray(w_eff, jnp.float32).reshape(D, 1)
    b_eff = jnp.asarray(b_eff, jnp.float32).reshape(1, 1)

    tile_budget, vmem_limit = _budgets()
    tb, td = _pick_tiles(B, D, x.dtype.itemsize, tile_budget, feature_tile)
    grid = (pl.cdiv(B, tb), pl.cdiv(D, td))

    out = pl.pallas_call(
        _fused_linear_kernel,
        out_shape=jax.ShapeDtypeStruct((B, 1), jnp.float32),
        grid=grid,
        in_specs=[
            pl.BlockSpec((tb, td), lambda i, k: (i, k)),            # x: streamed tiles
            pl.BlockSpec((td, 1), lambda i, k: (k, 0)),             # fused weight column
            pl.BlockSpec(memory_space=pltpu.MemorySpace.SMEM),      # fused bias scalar
        ],
        out_specs=pl.BlockSpec((tb, 1), lambda i, k: (i, 0)),       # resident accumulator
        compiler_params=pltpu.CompilerParams(
            dimension_semantics=("parallel", "arbitrary"),
            vmem_limit_bytes=vmem_limit,
        ),
    )(x, w_eff, b_eff)

    # PyTorch's x.squeeze(): (B,) in general, scalar if B == 1.
    return jnp.squeeze(out)


def weak_classifier_forward(x, w1, b1, w2, b2, *, feature_tile=None):
    """Convenience wrapper taking the original (unfused) nn.Linear parameters."""
    w_eff, b_eff = fuse_params(w1, b1, w2, b2)
    return weak_classifier_fused_forward(x, w_eff, b_eff, feature_tile=feature_tile)


def init_params(key, input_dim, k=2):
    """Deterministic init mimicking PyTorch nn.Linear default U(-1/sqrt(fan_in), +)."""
    k1, k2, k3, k4 = jax.random.split(key, 4)
    bound1 = 1.0 / jnp.sqrt(jnp.float32(input_dim))
    bound2 = 1.0 / jnp.sqrt(jnp.float32(k))
    w1 = jax.random.uniform(k1, (k, input_dim), jnp.float32, -bound1, bound1)
    b1 = jax.random.uniform(k2, (k,), jnp.float32, -bound1, bound1)
    w2 = jax.random.uniform(k3, (1, k), jnp.float32, -bound2, bound2)
    b2 = jax.random.uniform(k4, (1,), jnp.float32, -bound2, bound2)
    return w1, b1, w2, b2


if __name__ == "__main__":
    key = jax.random.PRNGKey(0)
    kx, kp, kx2, kp2, kx3, kp3 = jax.random.split(key, 6)

    # Check 1: small shapes consistent with the module (batch=8, input_dim=32), f32.
    batch, input_dim = 8, 32
    x = jax.random.normal(kx, (batch, input_dim), dtype=jnp.float32)
    w1, b1, w2, b2 = init_params(kp, input_dim, k=2)
    w_eff, b_eff = fuse_params(w1, b1, w2, b2)
    out = jax.block_until_ready(weak_classifier_fused_forward(x, w_eff, b_eff))
    ref = jnp.squeeze((x @ w1.T + b1) @ w2.T + b2)
    assert out.shape == (batch,), out.shape
    assert jnp.allclose(out, ref, atol=1e-4, rtol=1e-4), float(jnp.max(jnp.abs(out - ref)))

    # Check 2: multi-step batch grid with a ragged last tile (600 rows -> 304 + 296), f32.
    B2, D2 = 600, 128
    x2 = jax.random.normal(kx2, (B2, D2), dtype=jnp.float32)
    p2 = init_params(kp2, D2, k=2)
    out2 = jax.block_until_ready(weak_classifier_forward(x2, *p2))
    ref2 = jnp.squeeze((x2 @ p2[0].T + p2[1]) @ p2[2].T + p2[3])
    assert out2.shape == (B2,), out2.shape
    assert jnp.allclose(out2, ref2, atol=2e-4, rtol=2e-4), float(jnp.max(jnp.abs(out2 - ref2)))

    # Check 3: native-bf16 streaming + feature-axis (reduction) tiling with f32 accumulate.
    B3, D3 = 512, 256
    x3 = jax.random.normal(kx3, (B3, D3), dtype=jnp.float32).astype(jnp.bfloat16)
    p3 = init_params(kp3, D3, k=2)
    w_eff3, b_eff3 = fuse_params(*p3)
    out3 = jax.block_until_ready(
        weak_classifier_fused_forward(x3, w_eff3, b_eff3, feature_tile=128))
    x3f = x3.astype(jnp.float32)
    ref3 = jnp.squeeze((x3f @ p3[0].T + p3[1]) @ p3[2].T + p3[3])
    assert out3.shape == (B3,), out3.shape
    assert jnp.allclose(out3, ref3, atol=2e-4, rtol=2e-4), float(jnp.max(jnp.abs(out3 - ref3)))

    print("KERNEL_OK")
</pallas_src>

<mosaic_0001>
module attributes {stable_mosaic.version = 11 : i64} {
  func.func @_fused_linear_kernel(%arg0: i32, %arg1: i32, %arg2: memref<8x32xf32, #tpu.memory_space<vmem>>, %arg3: memref<32x1xf32, #tpu.memory_space<vmem>>, %arg4: memref<1x1xf32, #tpu.memory_space<smem>>, %arg5: memref<8x1xf32, #tpu.memory_space<vmem>>) attributes {dimension_semantics = [#tpu.dimension_semantics<parallel>, #tpu.dimension_semantics<arbitrary>], iteration_bounds = array<i64: 1, 1>, scalar_prefetch = 0 : i64, scratch_operands = 0 : i64, tpu.core_type = #tpu.core_type<tc>, window_params = [{transform_indices = @transform_0, window_bounds = array<i64: 8, 32>}, {transform_indices = @transform_1, window_bounds = array<i64: 32, 1>}, {transform_indices = @transform_2, window_bounds = array<i64: 1, 1>}, {transform_indices = @transform_3, window_bounds = array<i64: 8, 1>}]} {
    %c0_i32 = arith.constant 0 : i32
    %0 = arith.cmpi eq, %arg1, %c0_i32 : i32
    %1 = arith.extui %0 : i1 to i32
    %c0_i32_0 = arith.constant 0 : i32
    %2 = arith.cmpi ne, %1, %c0_i32_0 : i32
    scf.if %2 {
      %cst_10 = arith.constant 0.000000e+00 : f32
      %12 = vector.broadcast %cst_10 : f32 to vector<8x1xf32>
      %c0_11 = arith.constant 0 : index
      %c0_12 = arith.constant 0 : index
      %13 = vector.load %arg5[%c0_11, %c0_12] : memref<8x1xf32, #tpu.memory_space<vmem>>, vector<8x1xf32>
      tpu.vector_store %arg5[%c0_11, %c0_12], %12 {strides = array<i32>} : memref<8x1xf32, #tpu.memory_space<vmem>>, vector<8x1xf32>,
    } else {
    }
    %c0 = arith.constant 0 : index
    %c0_1 = arith.constant 0 : index
    %3 = vector.load %arg2[%c0, %c0_1] : memref<8x32xf32, #tpu.memory_space<vmem>>, vector<8x32xf32>
    %c0_2 = arith.constant 0 : index
    %c0_3 = arith.constant 0 : index
    %4 = vector.load %arg5[%c0_2, %c0_3] : memref<8x1xf32, #tpu.memory_space<vmem>>, vector<8x1xf32>
    %c0_4 = arith.constant 0 : index
    %c0_5 = arith.constant 0 : index
    %5 = vector.load %arg3[%c0_4, %c0_5] : memref<32x1xf32, #tpu.memory_space<vmem>>, vector<32x1xf32>
    %cst = arith.constant dense<0.000000e+00> : vector<8x1xf32>
    %6 = tpu.matmul %3, %5, %cst {dimension_numbers = #tpu.dot_dimension_numbers<[1], [0], [0], [1], [0, 0, 1, 1], [], []>} : vector<8x32xf32>, vector<32x1xf32>, vector<8x1xf32> -> vector<8x1xf32>
    %7 = arith.addf %4, %6 : vector<8x1xf32>
    %c0_6 = arith.constant 0 : index
    %c0_7 = arith.constant 0 : index
    %8 = vector.load %arg5[%c0_6, %c0_7] : memref<8x1xf32, #tpu.memory_space<vmem>>, vector<8x1xf32>
    tpu.vector_store %arg5[%c0_6, %c0_7], %7 {strides = array<i32>} : memref<8x1xf32, #tpu.memory_space<vmem>>, vector<8x1xf32>,
    %c0_i32_8 = arith.constant 0 : i32
    %9 = arith.cmpi eq, %arg1, %c0_i32_8 : i32
    %10 = arith.extui %9 : i1 to i32
    %c0_i32_9 = arith.constant 0 : i32
    %11 = arith.cmpi ne, %10, %c0_i32_9 : i32
    scf.if %11 {
      %c0_10 = arith.constant 0 : index
      %c0_11 = arith.constant 0 : index
      %12 = vector.load %arg5[%c0_10, %c0_11] : memref<8x1xf32, #tpu.memory_space<vmem>>, vector<8x1xf32>
      %c0_12 = arith.constant 0 : index
      %c0_13 = arith.constant 0 : index
      %13 = memref.load %arg4[%c0_12, %c0_13] : memref<1x1xf32, #tpu.memory_space<smem>>
      %14 = vector.broadcast %13 : f32 to vector<8x1xf32>
      %15 = arith.addf %12, %14 : vector<8x1xf32>
      %c0_14 = arith.constant 0 : index
      %c0_15 = arith.constant 0 : index
      %16 = vector.load %arg5[%c0_14, %c0_15] : memref<8x1xf32, #tpu.memory_space<vmem>>, vector<8x1xf32>
      tpu.vector_store %arg5[%c0_14, %c0_15], %15 {strides = array<i32>} : memref<8x1xf32, #tpu.memory_space<vmem>>, vector<8x1xf32>,
    } else {
    }
    return
  }
  func.func @transform_0(%arg0: i32, %arg1: i32) -> (i32, i32) {
    %c0_i32 = arith.constant 0 : i32
    return %arg0, %arg1 : i32, i32
  }
  func.func @transform_1(%arg0: i32, %arg1: i32) -> (i32, i32) {
    %c0_i32 = arith.constant 0 : i32
    %c0_i32_0 = arith.constant 0 : i32
    return %arg1, %c0_i32 : i32, i32
  }
  func.func @transform_2(%arg0: i32, %arg1: i32) -> (i32, i32) {
    %c0_i32 = arith.constant 0 : i32
    %c0_i32_0 = arith.constant 0 : i32
    %c0_i32_1 = arith.constant 0 : i32
    return %c0_i32, %c0_i32_0 : i32, i32
  }
  func.func @transform_3(%arg0: i32, %arg1: i32) -> (i32, i32) {
    %c0_i32 = arith.constant 0 : i32
    %c0_i32_0 = arith.constant 0 : i32
    return %arg0, %c0_i32 : i32, i32
  }
}

</mosaic_0001>

<llo_original>
// kernel: tpu_custom_call.1
$region0: #{tpu_custom_call.1}
  #allocation0 [shape = 'u32[]', space=smem, size = 0x4, offset = 0x4, fixed_abs, tag = 'smem constant byte address 0x4 - core index']
  #allocation1 [shape = 'u32[72,128]{1,0:T(1,128)}', space=vmem, size = 0x9000, scoped, tag = 'internal scratch']
  #allocation2 [shape = 'f32[1,1]{1,0:T(1,128)S(6)}', space=smem, size = 0x200, scoped, tag = 'scoped memory for tpu_custom_call.1']
  %s0 = inlined_call_operand.vmem [shape: f32[8,32], index: 0, kind: input, shape index: {}]
  %s1 = inlined_call_operand.vmem [shape: f32[32,1], index: 1, kind: input, shape index: {}]
  %s2 = inlined_call_operand.<no memory space> [shape: f32[1,1], index: 2, kind: input, shape index: {}]
  %s3 = inlined_call_operand.vmem [shape: f32[8,1], index: 3, kind: output, shape index: {}]
  %s4 = sld [smem:[#allocation0]]
  $region30: #{tpu_custom_call.1} parent=0
    _
  %s6 = ssub.s32 1, %s4
  %s7 = scalar_select 0, %s6, %s4
  %8 = sst [smem:[#allocation2]] %s2
  // Predicated region
  $region2: #{tpu_custom_call.1} parent=0 // pred_check
    _
  $region3: #{tpu_custom_call.1} parent=0 // pred_check_branch
    %10 = sbr.rel (0) target = $region5
  $region4: #{tpu_custom_call.1} parent=0 // pred_region
    _
  $region5: #{tpu_custom_call.1} parent=0 // pred_fallthru
    _
  // Predicated region
  $region6: #{tpu_custom_call.1} parent=0 // pred_check
    _
  $region7: #{tpu_custom_call.1} parent=0 // pred_check_branch
    %12 = sbr.rel (0) target = $region9
  $region8: #{tpu_custom_call.1} parent=0 // pred_region
    _
  $region9: #{tpu_custom_call.1} parent=0 // pred_fallthru
    _
  // Predicated region
  $region10: #{tpu_custom_call.1} parent=0 // pred_check
    _
  $region11: #{tpu_custom_call.1} parent=0 // pred_check_branch
    %14 = sbr.rel (0) target = $region13
  $region12: #{tpu_custom_call.1} parent=0 // pred_region
    _
  $region13: #{tpu_custom_call.1} parent=0 // pred_fallthru
    _
  %p15 = scmp.eq.s32.totalorder 0, 0
  // Predicated region
  $region14: #{tpu_custom_call.1} parent=0 // pred_check
    %p16 = pneg %p15
  $region15: #{tpu_custom_call.1} parent=0 // pred_check_branch
    %18 = sbr.rel (%p16) target = $region17
  $region16: #{tpu_custom_call.1} parent=0 // pred_region
    %vm19 = vcmask 7168
    %20 = vst.msk [vmem:[%s3] sm:$0xff] %vm19, 0.0
  $region17: #{tpu_custom_call.1} parent=0 // pred_fallthru
    _
  %v21 = vld [vmem:[%s0] sm:$0xff]
  %v22 = vld [vmem:[%s3] sm:$0xff]
  %v23 = vld [vmem:[%s1] sm:$0xff]
  %v24 = vld [vmem:[%s1 + $0x8] sm:$0xff]
  %v25 = vld [vmem:[%s1 + $0x10] sm:$0xff]
  %v26 = vld [vmem:[%s1 + $0x18] sm:$0xff]
  %vm27 = vcmask 261120
  %v29 = vsel %vm27, %v21, 0
  %31 = vmatpush.msra.mxu0 0.0
  %32 = vmatpush.msra.mxu0 0.0
  %33 = vmatpush.msra.mxu0 0.0
  %34 = vmatpush.msra.mxu0 0.0
  %35 = vmatpush.msra.mxu0 0.0
  %36 = vmatpush.msra.mxu0 0.0
  %37 = vmatpush.msra.mxu0 0.0
  %38 = vmatpush.msra.mxu0 0.0
  %39 = vmatpush.msra.mxu0 0.0
  %40 = vmatpush.msra.mxu0 0.0
  %41 = vmatpush.msra.mxu0 0.0
  %42 = vmatpush.msra.mxu0 0.0
  %43 = vmatpush.msra.mxu0 %v26
  %44 = vmatpush.msra.mxu0 %v25
  %45 = vmatpush.msra.mxu0 %v24
  %46 = vmatpush.msra.mxu0 %v23
  %47 = vmatmul.f32.gmra.mxu0 %v29
  %v48 = vpop.f32.mrf.mxu0
  %v49 = vadd.f32 0.0, %v48
  %50 = vdwg.mxu0
  %v51 = vadd.f32 %v22, %v49
  %vm52 = vcmask 7168
  %53 = vst.msk [vmem:[%s3] sm:$0xff] %vm52, %v51
  // Predicated region
  $region18: #{tpu_custom_call.1} parent=0 // pred_check
    %p54 = pneg %p15
  $region19: #{tpu_custom_call.1} parent=0 // pred_check_branch
    %56 = sbr.rel (%p54) target = $region21
  $region20: #{tpu_custom_call.1} parent=0 // pred_region
    %v57 = vld [vmem:[%s3] sm:$0xff]
    %s58 = sld [smem:[#allocation2]]
    %v59 = vstv %s58
    %v60 = vadd.f32 %v57, %v59
    %61 = vst.msk [vmem:[%s3] sm:$0xff] %vm52, %v60
  $region21: #{tpu_custom_call.1} parent=0 // pred_fallthru
    _
  // Predicated region
  $region22: #{tpu_custom_call.1} parent=0 // pred_check
    _
  $region23: #{tpu_custom_call.1} parent=0 // pred_check_branch
    %63 = sbr.rel (0) target = $region25
  $region24: #{tpu_custom_call.1} parent=0 // pred_region
    _
  $region25: #{tpu_custom_call.1} parent=0 // pred_fallthru
    _
  // Predicated region
  $region26: #{tpu_custom_call.1} parent=0 // pred_check
    _
  $region27: #{tpu_custom_call.1} parent=0 // pred_check_branch
    %65 = sbr.rel (0) target = $region29
  $region28: #{tpu_custom_call.1} parent=0 // pred_region
    _
  $region29: #{tpu_custom_call.1} parent=0 // pred_fallthru
    _

</llo_original>
